<compile_context>
chip_gen: v6e
topology: v6e:2x2x1
jax: 0.10.0
libtpu: 0.0.40
codegen_flags: <defaults>
</compile_context>

<pallas_src>
import jax
import jax.numpy as jnp
from jax import lax
from jax.experimental import pallas as pl
from jax.experimental.pallas import tpu as pltpu


# Below this K, a dot is better done as unrolled VPU multiply-adds than a
# single (mostly zero-padded) MXU pass + result-FIFO drain.
_VPU_K_THRESHOLD = 8


def _linear_kernel(x_ref, wt_ref, b_ref, o_ref):
    """y = x @ Wt + b, with Wt already (IN, OUT)."""
    x = x_ref[...]        # (B, IN)   float32
    wt = wt_ref[...]      # (IN, OUT) float32, layout-native for contraction
    b = b_ref[...]        # (1, OUT)  float32
    in_features = x_ref.shape[1]   # static at trace time

    if in_features <= _VPU_K_THRESHOLD:
        # Sum of rank-1 updates, fully unrolled at trace time: stays on the VPU
        # and skips MXU latency + MRF/MRB pop for a K=3, N=2 problem.
        acc = b                                        # (1, OUT), broadcasts
        for k in range(in_features):
            acc = acc + x[:, k:k + 1] * wt[k:k + 1, :]  # (B,1)*(1,OUT)->(B,OUT)
    else:
        # General path: MXU contraction with f32 accumulation.
        acc = lax.dot_general(
            x, wt,
            dimension_numbers=(((1,), (0,)), ((), ())),
            preferred_element_type=jnp.float32,
        ) + b

    o_ref[...] = acc.astype(o_ref.dtype)   # single cast, on the store path


def prepare_linear_params(weight, bias):
    """One-time parameter prep (init-time, never per forward):
    nn.Linear's (OUT, IN) weight -> layout-native (IN, OUT); bias -> (1, OUT)
    so it lives as a normal 2D VMEM tile."""
    return weight.T, bias.reshape(1, -1)


def simple_model_forward(x, weight_t, bias2d):
    """Equivalent of SimpleModel.forward: torch.nn.Linear(3, 2)(x).

    Args:
      x:        (B, IN) float32
      weight_t: (IN, OUT) float32  (pre-transposed once at init)
      bias2d:   (1, OUT) float32
    """
    B, IN = x.shape
    IN_w, OUT = weight_t.shape
    assert IN == IN_w

    cost = pl.CostEstimate(
        flops=2 * B * IN * OUT,
        transcendentals=0,
        bytes_accessed=4 * (B * IN + IN * OUT + OUT + B * OUT),
    )

    # Gridless call: whole arrays land in VMEM once, kernel body runs once.
    return pl.pallas_call(
        _linear_kernel,
        out_shape=jax.ShapeDtypeStruct((B, OUT), x.dtype),
        in_specs=[
            pl.BlockSpec(memory_space=pltpu.MemorySpace.VMEM),  # x (B, IN)
            pl.BlockSpec(memory_space=pltpu.MemorySpace.VMEM),  # Wt (IN, OUT)
            pl.BlockSpec(memory_space=pltpu.MemorySpace.VMEM),  # bias (1, OUT)
        ],
        out_specs=pl.BlockSpec(memory_space=pltpu.MemorySpace.VMEM),
        cost_estimate=cost,
    )(x, weight_t, bias2d)


simple_model_forward_jit = jax.jit(simple_model_forward)


if __name__ == "__main__":
    IN_FEATURES, OUT_FEATURES, BATCH = 3, 2, 2

    # Deterministic input matching the torch example exactly: shape (2, 3).
    x = jnp.array([[2.0, 3.0, 1.0], [1.0, 2.0, 0.5]], dtype=jnp.float32)

    # Deterministic parameter init matching nn.Linear(3, 2) shapes:
    # weight: (out_features, in_features), bias: (out_features,)
    key = jax.random.PRNGKey(0)
    k_w, k_b = jax.random.split(key, 2)
    bound = 1.0 / jnp.sqrt(jnp.float32(IN_FEATURES))
    weight = jax.random.uniform(
        k_w, (OUT_FEATURES, IN_FEATURES), minval=-bound, maxval=bound,
        dtype=jnp.float32)
    bias = jax.random.uniform(
        k_b, (OUT_FEATURES,), minval=-bound, maxval=bound, dtype=jnp.float32)

    # One-time param prep (the "init-time transpose" from the review).
    weight_t, bias2d = prepare_linear_params(weight, bias)

    out = simple_model_forward_jit(x, weight_t, bias2d)
    out = jax.block_until_ready(out)

    # Reference check against plain JAX (same math as torch Linear).
    ref = x @ weight.T + bias
    assert out.shape == (BATCH, OUT_FEATURES)
    assert jnp.allclose(out, ref, atol=1e-5, rtol=1e-5)

    print("KERNEL_OK")
</pallas_src>

<mosaic_0001>
module attributes {stable_mosaic.version = 11 : i64} {
  func.func @_linear_kernel(%arg0: memref<2x3xf32, #tpu.memory_space<vmem>>, %arg1: memref<3x2xf32, #tpu.memory_space<vmem>>, %arg2: memref<1x2xf32, #tpu.memory_space<vmem>>, %arg3: memref<2x2xf32, #tpu.memory_space<vmem>>) attributes {dimension_semantics = [], scalar_prefetch = 0 : i64, scratch_operands = 0 : i64, tpu.core_type = #tpu.core_type<tc>} {
    %c0 = arith.constant 0 : index
    %c0_0 = arith.constant 0 : index
    %0 = vector.load %arg0[%c0, %c0_0] : memref<2x3xf32, #tpu.memory_space<vmem>>, vector<2x3xf32>
    %c0_1 = arith.constant 0 : index
    %c0_2 = arith.constant 0 : index
    %1 = vector.load %arg1[%c0_1, %c0_2] : memref<3x2xf32, #tpu.memory_space<vmem>>, vector<3x2xf32>
    %c0_3 = arith.constant 0 : index
    %c0_4 = arith.constant 0 : index
    %2 = vector.load %arg2[%c0_3, %c0_4] : memref<1x2xf32, #tpu.memory_space<vmem>>, vector<1x2xf32>
    %3 = vector.extract_strided_slice %0 {offsets = [0, 0], sizes = [2, 1], strides = [1, 1]} : vector<2x3xf32> to vector<2x1xf32>
    %4 = vector.extract_strided_slice %1 {offsets = [0, 0], sizes = [1, 2], strides = [1, 1]} : vector<3x2xf32> to vector<1x2xf32>
    %5 = vector.broadcast %3 : vector<2x1xf32> to vector<2x2xf32>
    %6 = vector.broadcast %4 : vector<1x2xf32> to vector<2x2xf32>
    %7 = arith.mulf %5, %6 : vector<2x2xf32>
    %8 = vector.broadcast %2 : vector<1x2xf32> to vector<2x2xf32>
    %9 = arith.addf %8, %7 : vector<2x2xf32>
    %10 = vector.extract_strided_slice %0 {offsets = [0, 1], sizes = [2, 1], strides = [1, 1]} : vector<2x3xf32> to vector<2x1xf32>
    %11 = vector.extract_strided_slice %1 {offsets = [1, 0], sizes = [1, 2], strides = [1, 1]} : vector<3x2xf32> to vector<1x2xf32>
    %12 = vector.broadcast %10 : vector<2x1xf32> to vector<2x2xf32>
    %13 = vector.broadcast %11 : vector<1x2xf32> to vector<2x2xf32>
    %14 = arith.mulf %12, %13 : vector<2x2xf32>
    %15 = arith.addf %9, %14 : vector<2x2xf32>
    %16 = vector.extract_strided_slice %0 {offsets = [0, 2], sizes = [2, 1], strides = [1, 1]} : vector<2x3xf32> to vector<2x1xf32>
    %17 = vector.extract_strided_slice %1 {offsets = [2, 0], sizes = [1, 2], strides = [1, 1]} : vector<3x2xf32> to vector<1x2xf32>
    %18 = vector.broadcast %16 : vector<2x1xf32> to vector<2x2xf32>
    %19 = vector.broadcast %17 : vector<1x2xf32> to vector<2x2xf32>
    %20 = arith.mulf %18, %19 : vector<2x2xf32>
    %21 = arith.addf %15, %20 : vector<2x2xf32>
    %c0_5 = arith.constant 0 : index
    %c0_6 = arith.constant 0 : index
    %22 = vector.load %arg3[%c0_5, %c0_6] : memref<2x2xf32, #tpu.memory_space<vmem>>, vector<2x2xf32>
    tpu.vector_store %arg3[%c0_5, %c0_6], %21 {strides = array<i32>} : memref<2x2xf32, #tpu.memory_space<vmem>>, vector<2x2xf32>,
    return
  }
}

</mosaic_0001>

<llo_original>
// kernel: simple_model_forward.1
$region0: #{simple_model_forward.1}
  #allocation0 [shape = 'u32[]', space=smem, size = 0x4, offset = 0x4, fixed_abs, tag = 'smem constant byte address 0x4 - core index']
  #allocation1 [shape = 'u32[144,128]{1,0:T(1,128)}', space=vmem, size = 0x12000, scoped, tag = 'internal scratch']
  %s0 = inlined_call_operand.vmem [shape: f32[2,3], index: 0, kind: input, shape index: {}]
  %s1 = inlined_call_operand.vmem [shape: f32[3,2], index: 1, kind: input, shape index: {}]
  %s2 = inlined_call_operand.vmem [shape: f32[1,2], index: 2, kind: input, shape index: {}]
  %s3 = inlined_call_operand.hbm [shape: f32[2,2], index: 3, kind: output, shape index: {}]
  %s4 = sld [smem:[#allocation0]]
  $region22: #{simple_model_forward.1} parent=0
    _
  %s6 = ssub.s32 1, %s4
  %s7 = scalar_select 0, %s6, %s4
  $region1: #{simple_model_forward.1} parent=0
    #allocation2 [shape = 'u8[1024]{0}', space=vmem, size = 0x400, scoped, tag = 'output window, operand 0, single buffered']
    #allocation3 [shape = 's32[1]{0}', space=sflag, size = 0x4, scoped, tag = 'scoped memory for simple_model_forward.1']
    %8 = vsyncpa [#allocation3], 0
    // Predicated region
    $region2: #{simple_model_forward.1} parent=1 // pred_check
      _
    $region3: #{simple_model_forward.1} parent=1 // pred_check_branch
      %10 = sbr.rel (0) target = $region5
    $region4: #{simple_model_forward.1} parent=1 // pred_region
      _
    $region5: #{simple_model_forward.1} parent=1 // pred_fallthru
      _
    // Predicated region
    $region6: #{simple_model_forward.1} parent=1 // pred_check
      _
    $region7: #{simple_model_forward.1} parent=1 // pred_check_branch
      %12 = sbr.rel (0) target = $region9
    $region8: #{simple_model_forward.1} parent=1 // pred_region
      _
    $region9: #{simple_model_forward.1} parent=1 // pred_fallthru
      _
    // Predicated region
    $region10: #{simple_model_forward.1} parent=1 // pred_check
      _
    $region11: #{simple_model_forward.1} parent=1 // pred_check_branch
      %14 = sbr.rel (0) target = $region13
    $region12: #{simple_model_forward.1} parent=1 // pred_region
      _
    $region13: #{simple_model_forward.1} parent=1 // pred_fallthru
      _
    %v15 = vld [vmem:[%s0] sm:$0x3]
    %v16 = vld [vmem:[%s1] sm:$0x7]
    %v17 = vld [vmem:[%s2] sm:$0x1]
    %19 = vset.pattern.permute.xlu0 0
    %20 = vperm.xlu0 %19, %v15
    %v21 = vpop.permute.xlu0 %20
    %v23 = vlaneseq
    %v24 = vshrl.u32 %v23, 7
    %v25 = vsub.s32 0, %v24
    %v26 = vrot.slane %v16, %v25
    %v27 = vmul.f32 %v21, %v26
    %v29 = vlaneseq
    %v30 = vshrl.u32 %v29, 7
    %v31 = vsub.s32 0, %v30
    %v32 = vrot.slane %v17, %v31
    %v34 = vadd.f32 %v32, %v27
    %35 = vset.pattern.permute.xlu0 1
    %36 = vperm.xlu0 %35, %v15
    %v37 = vpop.permute.xlu0 %36
    %v39 = vlaneseq
    %v40 = vshrl.u32 %v39, 7
    %v41 = vsub.s32 1, %v40
    %v42 = vrot.slane %v16, %v41
    %v43 = vmul.f32 %v37, %v42
    %v44 = vadd.f32 %v34, %v43
    %45 = vset.pattern.permute.xlu0 2
    %46 = vperm.xlu0 %45, %v15
    %v47 = vpop.permute.xlu0 %46
    %v49 = vlaneseq
    %v50 = vshrl.u32 %v49, 7
    %v51 = vsub.s32 2, %v50
    %v52 = vrot.slane %v16, %v51
    %v53 = vmul.f32 %v47, %v52
    %v54 = vadd.f32 %v44, %v53
    %vm55 = vcmask 9216
    %56 = vst.msk [vmem:[#allocation2] sm:$0x3] %vm55, %v54
    // Predicated region
    $region14: #{simple_model_forward.1} parent=1 // pred_check
      _
    $region15: #{simple_model_forward.1} parent=1 // pred_check_branch
      %58 = sbr.rel (0) target = $region17
    $region16: #{simple_model_forward.1} parent=1 // pred_region
      %s60 = ssub.s32 32, 32
      %61 = vsyncadd [#allocation3], %s60
      %s63 = sshll.u32 [#allocation2], 4
      %s64 = int_to_ptr.vmem [resolvable:$true] %s63
      %66 = dma.vmem_to_hbm [thread:$0]  %s64, 32, %s3, [#allocation3]
    $region17: #{simple_model_forward.1} parent=1 // pred_fallthru
      _
    // Predicated region
    $region18: #{simple_model_forward.1} parent=1 // pred_check
      _
    $region19: #{simple_model_forward.1} parent=1 // pred_check_branch
      %68 = sbr.rel (0) target = $region21
    $region20: #{simple_model_forward.1} parent=1 // pred_region
      %69 = dma.done [#allocation3], 32
    $region21: #{simple_model_forward.1} parent=1 // pred_fallthru
      _
    %70 = vsyncpa [#allocation3], 1

</llo_original>
